<compile_context>
chip_gen: v5e
topology: v5e:2x2
jax: 0.10.0
libtpu: 0.0.40
codegen_flags: <defaults>
</compile_context>

<pallas_src>
import functools

import jax
import jax.numpy as jnp
from jax.experimental import pallas as pl
from jax.experimental.pallas import tpu as pltpu


def _sh_block_kernel(wb_ref, sv_ref, x_ref, o_ref, *, k, use_max, use_avg):
    """One grid step: `bt` images x `t_ho` output rows (t_hi = t_ho*k input rows).

    wb_ref: SMEM (2,) f32               -> [weight, bias] (scalar prefetch)
    sv_ref: VMEM (bt, 2, t_hi, W)       native dtype, dense rows
    x_ref : VMEM (bt, C, t_ho, Wo)      native dtype
    o_ref : VMEM (bt, C, t_ho, Wo)      native dtype
    """
    w = wb_ref[0]
    b = wb_ref[1]

    bt = sv_ref.shape[0]
    t_hi = sv_ref.shape[2]
    W = sv_ref.shape[3]
    t_ho = x_ref.shape[2]
    Wo = x_ref.shape[3]

    f32 = jnp.float32
    dot = functools.partial(jnp.dot,
                            precision=jax.lax.Precision.HIGHEST,
                            preferred_element_type=f32)

    # --- 0/1 selection matrices (exact extraction via MXU matmul) -----------
    # Row (sublane) selectors: pick input row i*k + j for output row i.
    ri = jax.lax.broadcasted_iota(jnp.int32, (t_ho, t_hi), 0)
    rp = jax.lax.broadcasted_iota(jnp.int32, (t_ho, t_hi), 1)
    row_sel = [(rp == ri * k + j).astype(f32) for j in range(k)]
    row_grp = ((rp >= ri * k) & (rp < ri * k + k)).astype(f32)

    # Column (lane) selectors: pick input col c*k + j for output col c.
    cw = jax.lax.broadcasted_iota(jnp.int32, (W, Wo), 0)
    cc = jax.lax.broadcasted_iota(jnp.int32, (W, Wo), 1)
    col_sel = [(cw == cc * k + j).astype(f32) for j in range(k)]
    col_grp = ((cw >= cc * k) & (cw < cc * k + k)).astype(f32)

    inv_kk = 1.0 / float(k * k)

    for bi in range(bt):                                    # static, small unroll
        # Highlight map on a dense (t_hi, W) slab, f32 math regardless of
        # storage dtype (v5e-safe).
        sat = 1.0 - sv_ref[bi, 0].astype(f32)               # (t_hi, W)
        val = sv_ref[bi, 1].astype(f32)                     # (t_hi, W)
        hl = jax.nn.sigmoid(w * (sat * val) + b)            # (t_hi, W)

        att = None
        if use_max:
            rows = [dot(row_sel[j], hl) for j in range(k)]  # each (t_ho, W)
            rmax = rows[0]
            for j in range(1, k):
                rmax = jnp.maximum(rmax, rows[j])
            gmax = dot(rmax, col_sel[0])                    # (t_ho, Wo)
            for j in range(1, k):
                gmax = jnp.maximum(gmax, dot(rmax, col_sel[j]))
            att = gmax
        if use_avg:
            if use_max:
                rsum = rows[0]
                for j in range(1, k):
                    rsum = rsum + rows[j]
            else:
                rsum = dot(row_grp, hl)                     # (t_ho, W)
            gavg = dot(rsum, col_grp) * inv_kk              # (t_ho, Wo)
            att = gavg if att is None else att + gavg
        if att is None:                                     # empty pool_type
            att = jnp.zeros((t_ho, Wo), f32)

        x = x_ref[bi].astype(f32)                           # (C, t_ho, Wo)
        # broadcast over channels == attention_map.repeat(1, C, 1, 1)
        o_ref[bi] = (x * att[None, :, :]).astype(o_ref.dtype)


def _divisors(n):
    return [d for d in range(1, n + 1) if n % d == 0]


def _round_up(n, m):
    return ((n + m - 1) // m) * m


def sh_block_forward(x, sv, weight, bias, pooling_size, pool_type=("max", "avg"),
                     target_block_bytes=2 * 1024 * 1024):
    """Pallas implementation of SH_Block.forward(x, sv)."""
    B, C, Ho, Wo = x.shape
    Bs, two, H, W = sv.shape
    k = int(pooling_size)
    assert Bs == B and two == 2 and H == Ho * k and W == Wo * k

    use_max = "max" in pool_type
    use_avg = "avg" in pool_type

    # weight / bias -> (2,) f32 scalar-prefetch (SMEM).
    wb = jnp.stack([jnp.asarray(weight, jnp.float32).reshape(()),
                    jnp.asarray(bias, jnp.float32).reshape(())])

    sv_item = jnp.dtype(sv.dtype).itemsize
    x_item = jnp.dtype(x.dtype).itemsize

    # ---- block-size heuristic (padded-VMEM budget, conservative for v7x) ----
    def _block_bytes(bt, t_ho):
        t_hi = t_ho * k
        sv_b = bt * 2 * _round_up(t_hi, 8) * _round_up(W, 128) * sv_item
        xo_b = 2 * bt * C * _round_up(t_ho, 8) * _round_up(Wo, 128) * x_item
        tmp_b = 3 * _round_up(t_hi, 8) * _round_up(W, 128) * 4   # f32 temps
        return sv_b + xo_b + tmp_b

    # t_ho must be a multiple of 8 or the full Ho so the (t_ho, Wo) and
    # (t_ho*k, W) trailing block dims obey the (8, 128) tiling rule.
    t_ho_cands = [d for d in _divisors(Ho) if d % 8 == 0 or d == Ho]
    fitting = [d for d in t_ho_cands if _block_bytes(1, d) <= target_block_bytes]
    t_ho = max(fitting) if fitting else min(t_ho_cands)

    bt_fitting = [d for d in _divisors(B)
                  if _block_bytes(d, t_ho) <= target_block_bytes]
    bt = max(bt_fitting) if bt_fitting else 1
    # Keep at least 2 grid steps when possible so both v7x TensorCores get work.
    if bt == B and B > 1 and (Ho // t_ho) == 1:
        bt = max(d for d in _divisors(B) if d < B)

    grid = (B // bt, Ho // t_ho)
    t_hi = t_ho * k

    kernel = functools.partial(_sh_block_kernel, k=k,
                               use_max=use_max, use_avg=use_avg)

    grid_spec = pltpu.PrefetchScalarGridSpec(
        num_scalar_prefetch=1,
        grid=grid,
        in_specs=[
            pl.BlockSpec((bt, 2, t_hi, W), lambda b, r, wb_ref: (b, 0, r, 0)),
            pl.BlockSpec((bt, C, t_ho, Wo), lambda b, r, wb_ref: (b, 0, r, 0)),
        ],
        out_specs=pl.BlockSpec((bt, C, t_ho, Wo), lambda b, r, wb_ref: (b, 0, r, 0)),
    )

    n_row_mm = k if use_max else (1 if use_avg else 0)
    n_col_mm = (k if use_max else 0) + (1 if use_avg else 0)
    cost = pl.CostEstimate(
        flops=int(B * H * W * 5                        # highlight map (VPU/EUP)
                  + 2 * B * Ho * t_hi * W * n_row_mm   # row-pool selector matmuls
                  + 2 * B * Ho * W * Wo * n_col_mm     # col-pool selector matmuls
                  + B * C * Ho * Wo),                  # x * att
        transcendentals=int(B * H * W),                # sigmoid
        bytes_accessed=int(sv.size * sv_item + 2 * x.size * x_item),
    )

    return pl.pallas_call(
        kernel,
        out_shape=jax.ShapeDtypeStruct((B, C, Ho, Wo), x.dtype),
        grid_spec=grid_spec,
        compiler_params=pltpu.CompilerParams(
            dimension_semantics=("parallel", "parallel"),
        ),
        cost_estimate=cost,
    )(wb, sv, x)


def sh_block_reference(x, sv, weight, bias, pooling_size, pool_type=("max", "avg")):
    """Pure-JAX reference matching the PyTorch module exactly."""
    k = int(pooling_size)
    saturation = (1.0 - sv[:, 0, :, :])[:, None, :, :]
    value = sv[:, 1, :, :][:, None, :, :]
    hl = jax.nn.sigmoid(weight * (saturation * value) + bias)   # (B,1,H,W)
    B, _, H, W = hl.shape
    hl_win = hl.reshape(B, 1, H // k, k, W // k, k)
    att = jnp.zeros((B, 1, H // k, W // k), jnp.float32)
    for pool in pool_type:
        if pool == "max":
            att = att + hl_win.max(axis=(3, 5))
        elif pool == "avg":
            att = att + hl_win.mean(axis=(3, 5))
    return x * att  # broadcast over channel == repeat(1, C, 1, 1)


if __name__ == "__main__":
    # Module config (deterministic init, as in __init__): weight=1.0, bias=0.0
    planes = 4
    pooling_size = 2
    weight = jnp.array([1.0], jnp.float32)
    bias = jnp.array([0.0], jnp.float32)

    B, H, W = 2, 16, 16
    Ho, Wo = H // pooling_size, W // pooling_size

    key = jax.random.PRNGKey(0)
    kx, ksv = jax.random.split(key)
    x = jax.random.normal(kx, (B, planes, Ho, Wo), jnp.float32)
    # sv in [0, 1] like saturation / value channels of an HSV image
    sv = jax.nn.sigmoid(jax.random.normal(ksv, (B, 2, H, W), jnp.float32))

    out = sh_block_forward(x, sv, weight, bias, pooling_size)
    out = jax.block_until_ready(out)

    ref = sh_block_reference(x, sv, weight[0], bias[0], pooling_size)
    assert out.shape == (B, planes, Ho, Wo)
    assert out.dtype == x.dtype
    assert jnp.allclose(out, ref, atol=1e-5, rtol=1e-5), (
        "mismatch vs reference, max abs err = %e"
        % float(jnp.max(jnp.abs(out - ref))))

    print("KERNEL_OK")
</pallas_src>

<mosaic_0001>
module attributes {stable_mosaic.version = 11 : i64} {
  func.func @_sh_block_kernel(%arg0: i32, %arg1: i32, %arg2: memref<2xf32, #tpu.memory_space<smem>>, %arg3: memref<1x2x16x16xf32, #tpu.memory_space<vmem>>, %arg4: memref<1x4x8x8xf32, #tpu.memory_space<vmem>>, %arg5: memref<1x4x8x8xf32, #tpu.memory_space<vmem>>) attributes {dimension_semantics = [#tpu.dimension_semantics<parallel>, #tpu.dimension_semantics<parallel>], iteration_bounds = array<i64: 2, 1>, scalar_prefetch = 1 : i64, scratch_operands = 0 : i64, tpu.core_type = #tpu.core_type<tc>, window_params = [{transform_indices = @transform_0, window_bounds = array<i64: 1, 2, 16, 16>}, {transform_indices = @transform_1, window_bounds = array<i64: 1, 4, 8, 8>}, {transform_indices = @transform_2, window_bounds = array<i64: 1, 4, 8, 8>}]} {
    %c0 = arith.constant 0 : index
    %0 = memref.load %arg2[%c0] : memref<2xf32, #tpu.memory_space<smem>>
    %c1 = arith.constant 1 : index
    %1 = memref.load %arg2[%c1] : memref<2xf32, #tpu.memory_space<smem>>
    %2 = tpu.iota {dimensions = array<i32: 0>} : vector<8x16xi32>
    %3 = tpu.iota {dimensions = array<i32: 1>} : vector<8x16xi32>
    %c2_i32 = arith.constant 2 : i32
    %4 = vector.broadcast %c2_i32 : i32 to vector<8x16xi32>
    %5 = arith.muli %2, %4 : vector<8x16xi32>
    %c0_i32 = arith.constant 0 : i32
    %6 = vector.broadcast %c0_i32 : i32 to vector<8x16xi32>
    %7 = arith.addi %5, %6 : vector<8x16xi32>
    %8 = arith.cmpi eq, %3, %7 : vector<8x16xi32>
    %9 = arith.extui %8 : vector<8x16xi1> to vector<8x16xi32>
    %10 = arith.sitofp %9 : vector<8x16xi32> to vector<8x16xf32>
    %c2_i32_0 = arith.constant 2 : i32
    %11 = vector.broadcast %c2_i32_0 : i32 to vector<8x16xi32>
    %12 = arith.muli %2, %11 : vector<8x16xi32>
    %c1_i32 = arith.constant 1 : i32
    %13 = vector.broadcast %c1_i32 : i32 to vector<8x16xi32>
    %14 = arith.addi %12, %13 : vector<8x16xi32>
    %15 = arith.cmpi eq, %3, %14 : vector<8x16xi32>
    %16 = arith.extui %15 : vector<8x16xi1> to vector<8x16xi32>
    %17 = arith.sitofp %16 : vector<8x16xi32> to vector<8x16xf32>
    %18 = tpu.iota {dimensions = array<i32: 0>} : vector<16x8xi32>
    %19 = tpu.iota {dimensions = array<i32: 1>} : vector<16x8xi32>
    %c2_i32_1 = arith.constant 2 : i32
    %20 = vector.broadcast %c2_i32_1 : i32 to vector<16x8xi32>
    %21 = arith.muli %19, %20 : vector<16x8xi32>
    %c0_i32_2 = arith.constant 0 : i32
    %22 = vector.broadcast %c0_i32_2 : i32 to vector<16x8xi32>
    %23 = arith.addi %21, %22 : vector<16x8xi32>
    %24 = arith.cmpi eq, %18, %23 : vector<16x8xi32>
    %25 = arith.extui %24 : vector<16x8xi1> to vector<16x8xi32>
    %26 = arith.sitofp %25 : vector<16x8xi32> to vector<16x8xf32>
    %c2_i32_3 = arith.constant 2 : i32
    %27 = vector.broadcast %c2_i32_3 : i32 to vector<16x8xi32>
    %28 = arith.muli %19, %27 : vector<16x8xi32>
    %c1_i32_4 = arith.constant 1 : i32
    %29 = vector.broadcast %c1_i32_4 : i32 to vector<16x8xi32>
    %30 = arith.addi %28, %29 : vector<16x8xi32>
    %31 = arith.cmpi eq, %18, %30 : vector<16x8xi32>
    %32 = arith.extui %31 : vector<16x8xi1> to vector<16x8xi32>
    %33 = arith.sitofp %32 : vector<16x8xi32> to vector<16x8xf32>
    %c2_i32_5 = arith.constant 2 : i32
    %34 = vector.broadcast %c2_i32_5 : i32 to vector<16x8xi32>
    %35 = arith.muli %19, %34 : vector<16x8xi32>
    %36 = arith.cmpi sge, %18, %35 : vector<16x8xi32>
    %c2_i32_6 = arith.constant 2 : i32
    %37 = vector.broadcast %c2_i32_6 : i32 to vector<16x8xi32>
    %38 = arith.muli %19, %37 : vector<16x8xi32>
    %c2_i32_7 = arith.constant 2 : i32
    %39 = vector.broadcast %c2_i32_7 : i32 to vector<16x8xi32>
    %40 = arith.addi %38, %39 : vector<16x8xi32>
    %41 = arith.cmpi slt, %18, %40 : vector<16x8xi32>
    %42 = arith.andi %36, %41 : vector<16x8xi1>
    %43 = arith.extui %42 : vector<16x8xi1> to vector<16x8xi32>
    %44 = arith.sitofp %43 : vector<16x8xi32> to vector<16x8xf32>
    %c0_8 = arith.constant 0 : index
    %c0_9 = arith.constant 0 : index
    %c0_10 = arith.constant 0 : index
    %c0_11 = arith.constant 0 : index
    %45 = vector.load %arg3[%c0_8, %c0_9, %c0_10, %c0_11] : memref<1x2x16x16xf32, #tpu.memory_space<vmem>>, vector<1x1x16x16xf32>
    %46 = vector.shape_cast %45 : vector<1x1x16x16xf32> to vector<16x16xf32>
    %cst = arith.constant 1.000000e+00 : f32
    %47 = vector.broadcast %cst : f32 to vector<16x16xf32>
    %48 = arith.subf %47, %46 : vector<16x16xf32>
    %c0_12 = arith.constant 0 : index
    %c1_13 = arith.constant 1 : index
    %c0_14 = arith.constant 0 : index
    %c0_15 = arith.constant 0 : index
    %49 = vector.load %arg3[%c0_12, %c1_13, %c0_14, %c0_15] : memref<1x2x16x16xf32, #tpu.memory_space<vmem>>, vector<1x1x16x16xf32>
    %50 = vector.shape_cast %49 : vector<1x1x16x16xf32> to vector<16x16xf32>
    %51 = arith.mulf %48, %50 : vector<16x16xf32>
    %52 = vector.broadcast %0 : f32 to vector<16x16xf32>
    %53 = arith.mulf %52, %51 : vector<16x16xf32>
    %54 = vector.broadcast %1 : f32 to vector<16x16xf32>
    %55 = arith.addf %53, %54 : vector<16x16xf32>
    %56 = arith.negf %55 : vector<16x16xf32>
    %57 = math.exp %56 : vector<16x16xf32>
    %cst_16 = arith.constant 1.000000e+00 : f32
    %58 = vector.broadcast %cst_16 : f32 to vector<16x16xf32>
    %59 = arith.addf %58, %57 : vector<16x16xf32>
    %60 = arith.divf %58, %59 : vector<16x16xf32>
    %cst_17 = arith.constant dense<0.000000e+00> : vector<8x16xf32>
    %61 = tpu.matmul %10, %60, %cst_17 {dimension_numbers = #tpu.dot_dimension_numbers<[1], [0], [0], [1], [0, 0, 1, 1], [], []>, precision = #tpu.contract_precision<fp32>} : vector<8x16xf32>, vector<16x16xf32>, vector<8x16xf32> -> vector<8x16xf32>
    %cst_18 = arith.constant dense<0.000000e+00> : vector<8x16xf32>
    %62 = tpu.matmul %17, %60, %cst_18 {dimension_numbers = #tpu.dot_dimension_numbers<[1], [0], [0], [1], [0, 0, 1, 1], [], []>, precision = #tpu.contract_precision<fp32>} : vector<8x16xf32>, vector<16x16xf32>, vector<8x16xf32> -> vector<8x16xf32>
    %63 = arith.maximumf %61, %62 : vector<8x16xf32>
    %cst_19 = arith.constant dense<0.000000e+00> : vector<8x8xf32>
    %64 = tpu.matmul %63, %26, %cst_19 {dimension_numbers = #tpu.dot_dimension_numbers<[1], [0], [0], [1], [0, 0, 1, 1], [], []>, precision = #tpu.contract_precision<fp32>} : vector<8x16xf32>, vector<16x8xf32>, vector<8x8xf32> -> vector<8x8xf32>
    %cst_20 = arith.constant dense<0.000000e+00> : vector<8x8xf32>
    %65 = tpu.matmul %63, %33, %cst_20 {dimension_numbers = #tpu.dot_dimension_numbers<[1], [0], [0], [1], [0, 0, 1, 1], [], []>, precision = #tpu.contract_precision<fp32>} : vector<8x16xf32>, vector<16x8xf32>, vector<8x8xf32> -> vector<8x8xf32>
    %66 = arith.maximumf %64, %65 : vector<8x8xf32>
    %67 = arith.addf %61, %62 : vector<8x16xf32>
    %cst_21 = arith.constant dense<0.000000e+00> : vector<8x8xf32>
    %68 = tpu.matmul %67, %44, %cst_21 {dimension_numbers = #tpu.dot_dimension_numbers<[1], [0], [0], [1], [0, 0, 1, 1], [], []>, precision = #tpu.contract_precision<fp32>} : vector<8x16xf32>, vector<16x8xf32>, vector<8x8xf32> -> vector<8x8xf32>
    %cst_22 = arith.constant 2.500000e-01 : f32
    %69 = vector.broadcast %cst_22 : f32 to vector<8x8xf32>
    %70 = arith.mulf %68, %69 : vector<8x8xf32>
    %71 = arith.addf %66, %70 : vector<8x8xf32>
    %c0_23 = arith.constant 0 : index
    %c0_24 = arith.constant 0 : index
    %c0_25 = arith.constant 0 : index
    %c0_26 = arith.constant 0 : index
    %72 = vector.load %arg4[%c0_23, %c0_24, %c0_25, %c0_26] : memref<1x4x8x8xf32, #tpu.memory_space<vmem>>, vector<1x4x8x8xf32>
    %73 = vector.shape_cast %72 : vector<1x4x8x8xf32> to vector<4x8x8xf32>
    %74 = vector.shape_cast %71 : vector<8x8xf32> to vector<1x8x8xf32>
    %75 = vector.broadcast %74 : vector<1x8x8xf32> to vector<4x8x8xf32>
    %76 = arith.mulf %73, %75 : vector<4x8x8xf32>
    %c0_27 = arith.constant 0 : index
    %c0_28 = arith.constant 0 : index
    %c0_29 = arith.constant 0 : index
    %c0_30 = arith.constant 0 : index
    %77 = vector.load %arg5[%c0_27, %c0_28, %c0_29, %c0_30] : memref<1x4x8x8xf32, #tpu.memory_space<vmem>>, vector<1x4x8x8xf32>
    %78 = vector.shape_cast %77 : vector<1x4x8x8xf32> to vector<4x8x8xf32>
    %79 = vector.shape_cast %76 : vector<4x8x8xf32> to vector<1x4x8x8xf32>
    tpu.vector_store %arg5[%c0_27, %c0_28, %c0_29, %c0_30], %79 {strides = array<i32>} : memref<1x4x8x8xf32, #tpu.memory_space<vmem>>, vector<1x4x8x8xf32>,
    return
  }
  func.func @transform_0(%arg0: i32, %arg1: i32, %arg2: memref<2xf32, #tpu.memory_space<smem>>) -> (i32, i32, i32, i32) {
    %c0_i32 = arith.constant 0 : i32
    %c0_i32_0 = arith.constant 0 : i32
    %c0_i32_1 = arith.constant 0 : i32
    return %arg0, %c0_i32, %arg1, %c0_i32_0 : i32, i32, i32, i32
  }
  func.func @transform_1(%arg0: i32, %arg1: i32, %arg2: memref<2xf32, #tpu.memory_space<smem>>) -> (i32, i32, i32, i32) {
    %c0_i32 = arith.constant 0 : i32
    %c0_i32_0 = arith.constant 0 : i32
    %c0_i32_1 = arith.constant 0 : i32
    return %arg0, %c0_i32, %arg1, %c0_i32_0 : i32, i32, i32, i32
  }
  func.func @transform_2(%arg0: i32, %arg1: i32, %arg2: memref<2xf32, #tpu.memory_space<smem>>) -> (i32, i32, i32, i32) {
    %c0_i32 = arith.constant 0 : i32
    %c0_i32_0 = arith.constant 0 : i32
    %c0_i32_1 = arith.constant 0 : i32
    return %arg0, %c0_i32, %arg1, %c0_i32_0 : i32, i32, i32, i32
  }
}

</mosaic_0001>

<llo_original>
// kernel: tpu_custom_call.1
$region0: #{tpu_custom_call.1}
  #allocation0 [shape = 'u32[]', space=smem, size = 0x4, offset = 0x4, fixed_abs, tag = 'smem constant byte address 0x4 - core index']
  #allocation1 [shape = 'u32[72,128]{1,0:T(1,128)}', space=vmem, size = 0x9000, scoped, tag = 'internal scratch']
  #allocation2 [shape = 's32[1]{0}', space=sflag, size = 0x4, scoped, tag = 'scoped memory for tpu_custom_call.1']
  #allocation3 [shape = 'u8[512]{0}', space=smem, size = 0x200, scoped, tag = 'prefetched SMEM operand 0']
  %s0 = inlined_call_operand.hbm [shape: f32[2], index: 0, kind: input, shape index: {}]
  %s1 = inlined_call_operand.hbm [shape: f32[2,2,16,16], index: 1, kind: input, shape index: {}]
  %s2 = inlined_call_operand.hbm [shape: f32[2,4,8,8], index: 2, kind: input, shape index: {}]
  %s3 = inlined_call_operand.hbm [shape: f32[2,4,8,8], index: 3, kind: output, shape index: {}]
  %s4 = sld [smem:[#allocation0]]
  $region49: #{tpu_custom_call.1} parent=0
    _
  %s6 = ssub.s32 1, %s4
  %s7 = scalar_select 0, %s6, %s4
  %s9 = sshll.u32 %s0, 4
  %s10 = int_to_ptr.hbm [resolvable:$true] %s9
  %12 = dma.hbm_to_smem %s10, 16, [#allocation3], [#allocation2]
  %14 = dma.done [#allocation2], 16
  %15 = sfence
  $region1: #{tpu_custom_call.1} parent=0
    #allocation4 [shape = 'u8[32768]{0}', space=vmem, size = 0x8000, scoped, tag = 'input window, operand 1']
    #allocation5 [shape = 's32[2]{0}', space=sflag, size = 0x8, scoped, tag = 'scoped memory for tpu_custom_call.1']
    #allocation6 [shape = 's32[2]{0}', space=sflag, size = 0x8, scoped, tag = 'scoped memory for tpu_custom_call.1']
    #allocation7 [shape = 'u8[32768]{0}', space=vmem, size = 0x8000, scoped, tag = 'input window, operand 2']
    #allocation8 [shape = 's32[2]{0}', space=sflag, size = 0x8, scoped, tag = 'scoped memory for tpu_custom_call.1']
    #allocation9 [shape = 'u8[32768]{0}', space=vmem, size = 0x8000, scoped, tag = 'output window, operand 0']
    %16 = vsyncpa [#allocation5], 0
    %s17 = scalar_lea.sflag [#allocation5], 1
    %18 = vsyncpa %s17, 0
    %19 = vsyncpa [#allocation8], 0
    %s20 = scalar_lea.sflag [#allocation8], 1
    %21 = vsyncpa %s20, 0
    %22 = vsyncpa [#allocation6], 0
    %s23 = scalar_lea.sflag [#allocation6], 1
    %24 = vsyncpa %s23, 0
    loop: start=0, step=1, limit=4
    $region2: #{tpu_custom_call.1} parent=1 // loop_pre_header
      _
    $region3: #{tpu_custom_call.1} parent=1 // loop_header
      %s26 = sphi 0, %s30
      %p27 = scmp.ge.s32.totalorder %s26, 4
      %s33 = sphi 0, %s45
      %s34 = sphi 0, %s41
      %s35 = sphi 0, %s33
      %s36 = sphi 0, %s34
      %s37 = sphi 0, %s35
      %s38 = sphi 0, %s36
      %s50 = sphi 0, %s52
      %s53 = sphi 0, %s50
      %s54 = sphi 0, %s53
      %s70 = sphi 0, %s54
      %s78 = sphi 0, %s80
      %s81 = sphi 0, %s78
      %s82 = sphi 0, %s81
      %s98 = sphi 0, %s82
      %s106 = sphi 0, %s108
      %s109 = sphi 0, %s106
      %s110 = sphi 0, %s109
      %s126 = sphi 0, %s110
    $region4: #{tpu_custom_call.1} parent=1 // loop_header_branch
      %29 = sbr.rel (%p27) target = $region8
    $region5: #{tpu_custom_call.1} parent=1 // loop_body
      %s31 = ssub.s32 %s26, 1
      %s32 = ssub.s32 %s26, 2
      %s39 = sadd.s32 1, %s34
      %p40 = scmp.ge.s32.totalorder %s39, 1
      %s41 = scalar_select %p40, 0, %s39
      %s42 = sadd.s32 1, %s33
      %s43 = scalar_select %p40, %s42, %s33
      %p44 = scmp.ge.s32.totalorder %s43, 2
      %s45 = scalar_select %p44, 0, %s43
      %s46 = ssub.s32 %s33, %s45
      %s47 = ssub.s32 %s34, %s41
      %s48 = sor.u32 %s46, %s47
      %p49 = scmp.eq.s32.totalorder %s48, 0
      %s51 = sadd.s32 %s50, 1
      %s52 = scalar_select %p49, %s50, %s51
      %p55 = pneg %p49
      %p56 = scmp.eq.s32.totalorder %s26, 1
      %p57 = por %p55, %p56
      %p58 = scmp.ne.s32.totalorder %s50, %s53
      %p59 = scmp.eq.s32.totalorder %s26, 0
      %p60 = por %p58, %p59
      %p61 = scmp.ne.s32.totalorder %s50, %s53
      %p62 = scmp.eq.s32.totalorder %s31, 1
      %p63 = por %p61, %p62
      %p64 = scmp.ne.s32.totalorder %s53, %s54
      %p65 = scmp.eq.s32.totalorder %s31, 0
      %p66 = por %p64, %p65
      %p67 = scmp.ne.s32.totalorder %s53, %s54
      %p68 = scmp.eq.s32.totalorder %s32, 1
      %p69 = por %p67, %p68
      %p71 = scmp.ne.s32.totalorder %s54, %s70
      %p72 = scmp.eq.s32.totalorder %s32, 0
      %p73 = por %p71, %p72
      %s74 = ssub.s32 %s33, %s45
      %s75 = ssub.s32 %s34, %s41
      %s76 = sor.u32 %s74, %s75
      %p77 = scmp.eq.s32.totalorder %s76, 0
      %s79 = sadd.s32 %s78, 1
      %s80 = scalar_select %p77, %s78, %s79
      %p83 = pneg %p77
      %p84 = scmp.eq.s32.totalorder %s26, 1
      %p85 = por %p83, %p84
      %p86 = scmp.ne.s32.totalorder %s78, %s81
      %p87 = scmp.eq.s32.totalorder %s26, 0
      %p88 = por %p86, %p87
      %p89 = scmp.ne.s32.totalorder %s78, %s81
      %p90 = scmp.eq.s32.totalorder %s31, 1
      %p91 = por %p89, %p90
      %p92 = scmp.ne.s32.totalorder %s81, %s82
      %p93 = scmp.eq.s32.totalorder %s31, 0
      %p94 = por %p92, %p93
      %p95 = scmp.ne.s32.totalorder %s81, %s82
      %p96 = scmp.eq.s32.totalorder %s32, 1
      %p97 = por %p95, %p96
      %p99 = scmp.ne.s32.totalorder %s82, %s98
      %p100 = scmp.eq.s32.totalorder %s32, 0
      %p101 = por %p99, %p100
      %s102 = ssub.s32 %s33, %s45
      %s103 = ssub.s32 %s34, %s41
      %s104 = sor.u32 %s102, %s103
      %p105 = scmp.eq.s32.totalorder %s104, 0
      %s107 = sadd.s32 %s106, 1
      %s108 = scalar_select %p105, %s106, %s107
      %p111 = pneg %p105
      %p112 = scmp.eq.s32.totalorder %s26, 1
      %p113 = por %p111, %p112
      %p114 = scmp.ne.s32.totalorder %s106, %s109
      %p115 = scmp.eq.s32.totalorder %s26, 0
      %p116 = por %p114, %p115
      %p117 = scmp.ne.s32.totalorder %s106, %s109
      %p118 = scmp.eq.s32.totalorder %s31, 1
      %p119 = por %p117, %p118
      %p120 = scmp.ne.s32.totalorder %s109, %s110
      %p121 = scmp.eq.s32.totalorder %s31, 0
      %p122 = por %p120, %p121
      %p123 = scmp.ne.s32.totalorder %s109, %s110
      %p124 = scmp.eq.s32.totalorder %s32, 1
      %p125 = por %p123, %p124
      %p127 = scmp.ne.s32.totalorder %s110, %s126
      %p128 = scmp.eq.s32.totalorder %s32, 0
      %p129 = por %p127, %p128
      %p130 = scmp.le.s32.totalorder 1, %s26
      %p131 = scmp.lt.s32.totalorder %s26, 3
      %p132 = pnand %p130, %p131
      %p133 = pneg %p132
      // Predicated region
      $region9: #{tpu_custom_call.1} parent=5 // pred_check
        _
      $region10: #{tpu_custom_call.1} parent=5 // pred_check_branch
        %135 = sbr.rel (%p132) target = $region12
      $region11: #{tpu_custom_call.1} parent=5 // pred_region
        %s136 = ssub.s32 %s26, 1
      $region12: #{tpu_custom_call.1} parent=5 // pred_fallthru
        _
      %p137 = scmp.lt.s32.totalorder %s26, 2
      // Predicated region
      $region13: #{tpu_custom_call.1} parent=5 // pred_check
        %p138 = pneg %p137
      $region14: #{tpu_custom_call.1} parent=5 // pred_check_branch
        %140 = sbr.rel (%p138) target = $region16
      $region15: #{tpu_custom_call.1} parent=5 // pred_region
        // Predicated region
        $region17: #{tpu_custom_call.1} parent=15 // pred_check
          %p141 = pneg %p60
        $region18: #{tpu_custom_call.1} parent=15 // pred_check_branch
          %143 = sbr.rel (%p141) target = $region20
        $region19: #{tpu_custom_call.1} parent=15 // pred_region
          %s144 = sand.u32 %s50, 1
          %s145 = scalar_lea.sflag [#allocation5], %s144
          %s146 = sand.u32 %s50, 1
          %s147 = smul.addr %s146, 32
          %s148 = scalar_lea.vmem [#allocation4], %s147
          %s149 = smul.u32 2, %s34
          %151 = vsyncadd %s145, 0
          %s152 = smul.addr %s33, 4
          %s153 = sadd.s32 %s149, %s152
          %s154 = smul.addr %s153, 8
          %s155 = scalar_lea.hbm %s1, %s154
          %s156 = sshll.u32 %s155, 4
          %s157 = int_to_ptr.hbm [resolvable:$true] %s156
          %s158 = sshll.u32 %s148, 4
          %s159 = int_to_ptr.vmem [resolvable:$true] %s158
          %164 = dma.hbm_to_vmem [thread:$0]  %s157, 512, %s159, %s145, 128, 128, 8
        $region20: #{tpu_custom_call.1} parent=15 // pred_fallthru
          _
        // Predicated region
        $region21: #{tpu_custom_call.1} parent=15 // pred_check
          %p165 = pneg %p88
        $region22: #{tpu_custom_call.1} parent=15 // pred_check_branch
          %167 = sbr.rel (%p165) target = $region24
        $region23: #{tpu_custom_call.1} parent=15 // pred_region
          %s168 = sand.u32 %s78, 1
          %s169 = scalar_lea.sflag [#allocation8], %s168
          %s170 = sand.u32 %s78, 1
          %s171 = smul.addr %s170, 32
          %s172 = scalar_lea.vmem [#allocation7], %s171
          %174 = vsyncadd %s169, 0
          %s175 = smul.addr %s33, 4
          %s176 = sadd.s32 %s34, %s175
          %s177 = smul.addr %s176, 8
          %s178 = scalar_lea.hbm %s2, %s177
          %s179 = sshll.u32 %s178, 4
          %s180 = int_to_ptr.hbm [resolvable:$true] %s179
          %s181 = sshll.u32 %s172, 4
          %s182 = int_to_ptr.vmem [resolvable:$true] %s181
          %187 = dma.hbm_to_vmem [thread:$0]  %s180, 512, %s182, %s169, 128, 128, 8
        $region24: #{tpu_custom_call.1} parent=15 // pred_fallthru
          _
      $region16: #{tpu_custom_call.1} parent=5 // pred_fallthru
        _
      %p188 = scmp.le.s32.totalorder 1, %s26
      %p189 = scmp.lt.s32.totalorder %s26, 3
      %p190 = pnand %p188, %p189
      %p191 = pneg %p190
      // Predicated region
      $region25: #{tpu_custom_call.1} parent=5 // pred_check
        _
      $region26: #{tpu_custom_call.1} parent=5 // pred_check_branch
        %193 = sbr.rel (%p190) target = $region28
      $region27: #{tpu_custom_call.1} parent=5 // pred_region
        %s194 = ssub.s32 %s26, 1
        %s195 = sand.u32 %s53, 1
        %s196 = scalar_lea.sflag [#allocation5], %s195
        %s197 = sand.u32 %s53, 1
        %s198 = smul.addr %s197, 32
        %s199 = scalar_lea.vmem [#allocation4], %s198
        // Predicated region
        $region29: #{tpu_custom_call.1} parent=27 // pred_check
          %p200 = pneg %p66
        $region30: #{tpu_custom_call.1} parent=27 // pred_check_branch
          %202 = sbr.rel (%p200) target = $region32
        $region31: #{tpu_custom_call.1} parent=27 // pred_region
          %204 = dma.done %s196, 512
        $region32: #{tpu_custom_call.1} parent=27 // pred_fallthru
          _
        %s205 = sand.u32 %s81, 1
        %s206 = scalar_lea.sflag [#allocation8], %s205
        %s207 = sand.u32 %s81, 1
        %s208 = smul.addr %s207, 32
        %s209 = scalar_lea.vmem [#allocation7], %s208
        // Predicated region
        $region33: #{tpu_custom_call.1} parent=27 // pred_check
          %p210 = pneg %p94
        $region34: #{tpu_custom_call.1} parent=27 // pred_check_branch
          %212 = sbr.rel (%p210) target = $region36
        $region35: #{tpu_custom_call.1} parent=27 // pred_region
          %214 = dma.done %s206, 512
        $region36: #{tpu_custom_call.1} parent=27 // pred_fallthru
          _
        %s215 = sand.u32 %s53, 1
        %s216 = scalar_lea.sflag [#allocation5], %s215
        %s217 = sand.u32 %s53, 1
        %s218 = smul.addr %s217, 32
        %s219 = scalar_lea.vmem [#allocation4], %s218
        %p220 = pneg %p66
        %p221 = pneg %p63
        %s222 = sand.u32 %s81, 1
        %s223 = scalar_lea.sflag [#allocation8], %s222
        %s224 = sand.u32 %s81, 1
        %s225 = smul.addr %s224, 32
        %s226 = scalar_lea.vmem [#allocation7], %s225
        %p227 = pneg %p94
        %p228 = pneg %p91
        %p229 = pneg %p122
        %p230 = pneg %p119
        %s231 = sand.u32 %s109, 1
        %s232 = scalar_lea.sflag [#allocation6], %s231
        %s233 = sand.u32 %s109, 1
        %s234 = smul.addr %s233, 32
        %s235 = scalar_lea.vmem [#allocation9], %s234
        %s236 = smul.u32 2, %s36
        %s237 = sld [smem:[#allocation3]]
        %s238 = sld [smem:[#allocation3 + $0x1]]
        %v239 = vlaneseq
        %v240 = vshrl.u32 %v239, 7
        %v241 = vlaneseq
        %v242 = vand.u32 %v241, 127
        %v243 = vmul.u32 %v240, 2
        %vm244 = vcmp.eq.s32.totalorder %v242, %v243
        %v245 = vsel %vm244, 1, 0
        %v246 = vcvt.s32.f32 %v245
        %v247 = vadd.s32 %v243, 1
        %vm248 = vcmp.eq.s32.totalorder %v242, %v247
        %v249 = vsel %vm248, 1, 0
        %v250 = vcvt.s32.f32 %v249
        %v251 = vadd.s32 %v240, 8
        %v252 = vmul.u32 %v242, 2
        %vm253 = vcmp.eq.s32.totalorder %v240, %v252
        %vm254 = vcmp.eq.s32.totalorder %v251, %v252
        %v255 = vsel %vm253, 1, 0
        %v256 = vsel %vm254, 1, 0
        %v257 = vcvt.s32.f32 %v255
        %v258 = vcvt.s32.f32 %v256
        %v259 = vadd.s32 %v252, 1
        %vm260 = vcmp.eq.s32.totalorder %v240, %v259
        %vm261 = vcmp.eq.s32.totalorder %v251, %v259
        %v262 = vsel %vm260, 1, 0
        %v263 = vsel %vm261, 1, 0
        %v264 = vcvt.s32.f32 %v262
        %v265 = vcvt.s32.f32 %v263
        %vm266 = vcmp.ge.s32.totalorder %v240, %v252
        %vm267 = vcmp.ge.s32.totalorder %v251, %v252
        %v268 = vadd.s32 %v252, 2
        %vm269 = vcmp.lt.s32.totalorder %v240, %v268
        %vm270 = vcmp.lt.s32.totalorder %v251, %v268
        %vm271 = vmand %vm266, %vm269
        %vm272 = vmand %vm267, %vm270
        %v273 = vsel %vm271, 1, 0
        %v274 = vsel %vm272, 1, 0
        %v275 = vcvt.s32.f32 %v273
        %v276 = vcvt.s32.f32 %v274
        %v277 = vld [vmem:[%s199] sm:$0xff]
        %v278 = vld [vmem:[%s199 + $0x8] sm:$0xff]
        %v279 = vsub.f32 1.0, %v277
        %v280 = vsub.f32 1.0, %v278
        %s281 = scalar_lea.vmem %s199, 16 [#allocation4]
        %v282 = vld [vmem:[%s281] sm:$0xff]
        %v283 = vld [vmem:[%s281 + $0x8] sm:$0xff]
        %v284 = vmul.f32 %v279, %v282
        %v285 = vmul.f32 %v280, %v283
        %v286 = vstv %s237
        %v287 = vmul.f32 %v286, %v284
        %v288 = vmul.f32 %v286, %v285
        %v289 = vstv %s238
        %v290 = vadd.f32 %v287, %v289
        %v291 = vadd.f32 %v288, %v289
        %v292 = vxor.u32 %v290, 2147483648
        %v293 = vxor.u32 %v291, 2147483648
        %v294 = vmul.f32 %v292, 1.442695
        %v295 = vpow.pop %v294
        %v296 = vmul.f32 %v293, 1.442695
        %v297 = vpow.pop %v296
        %v298 = vadd.f32 %v295, 1.0
        %v299 = vadd.f32 %v297, 1.0
        %v300 = vrcp.pop %v298
        %v301 = vmul.f32 %v298, %v300
        %v302 = vsub.f32 1.0, %v301
        %v303 = vmul.f32 %v300, %v302
        %v304 = vadd.f32 %v300, %v303
        %vm305 = vweird.f32 %v298
        %vm306 = vweird.f32 %v300
        %vm307 = vmor %vm305, %vm306
        %v308 = vsel %vm307, %v300, %v304
        %v309 = vand.u32 2147483647, %v298
        %vm310 = vcmp.eq.f32.partialorder %v309, 8.507059e+37
        %v311 = vand.u32 %v298, 2147483648
        %v312 = vor.u32 1.1754944e-38, %v311
        %v313 = vsel %vm310, %v312, %v308
        %v314 = vmul.f32 1.0, %v313
        %v315 = vrcp.pop %v299
        %v316 = vmul.f32 %v299, %v315
        %v317 = vsub.f32 1.0, %v316
        %v318 = vmul.f32 %v315, %v317
        %v319 = vadd.f32 %v315, %v318
        %vm320 = vweird.f32 %v299
        %vm321 = vweird.f32 %v315
        %vm322 = vmor %vm320, %vm321
        %v323 = vsel %vm322, %v315, %v319
        %v324 = vand.u32 2147483647, %v299
        %vm325 = vcmp.eq.f32.partialorder %v324, 8.507059e+37
        %v326 = vand.u32 %v299, 2147483648
        %v327 = vor.u32 1.1754944e-38, %v326
        %v328 = vsel %vm325, %v327, %v323
        %v329 = vmul.f32 1.0, %v328
        %vm330 = vcmask 130048
        %v332 = vsel %vm330, %v246, 0
        %334 = vmatpush.msra.mxu0 0.0
        %335 = vmatpush.msra.mxu0 0.0
        %336 = vmatpush.msra.mxu0 0.0
        %337 = vmatpush.msra.mxu0 0.0
        %338 = vmatpush.msra.mxu0 0.0
        %339 = vmatpush.msra.mxu0 0.0
        %340 = vmatpush.msra.mxu0 0.0
        %341 = vmatpush.msra.mxu0 0.0
        %342 = vmatpush.msra.mxu0 0.0
        %343 = vmatpush.msra.mxu0 0.0
        %344 = vmatpush.msra.mxu0 0.0
        %345 = vmatpush.msra.mxu0 0.0
        %346 = vmatpush.msra.mxu0 0.0
        %347 = vmatpush.msra.mxu0 0.0
        %v348 = vand.u32 %v329, 4294901760
        %349 = vmatpush.msra.mxu0 %v348
        %v350 = vand.u32 %v314, 4294901760
        %351 = vmatpush.msra.mxu0 %v350
        %v352 = vand.u32 %v332, 4294901760
        %v353 = vsub.f32 %v332, %v352
        %v354 = vand.u32 %v353, 4294901760
        %v355 = vsub.f32 %v353, %v354
        %v356 = vand.u32 %v355, 4294901760
        %357 = vmatmul.f32.gmra.mxu0 %v356
        %v358 = vpop.f32.mrf.mxu0
        %v359 = vadd.f32 0.0, %v358
        %360 = vdwg.mxu0
        %361 = vmatpush.msra.mxu0 0.0
        %362 = vmatpush.msra.mxu0 0.0
        %363 = vmatpush.msra.mxu0 0.0
        %364 = vmatpush.msra.mxu0 0.0
        %365 = vmatpush.msra.mxu0 0.0
        %366 = vmatpush.msra.mxu0 0.0
        %367 = vmatpush.msra.mxu0 0.0
        %368 = vmatpush.msra.mxu0 0.0
        %369 = vmatpush.msra.mxu0 0.0
        %370 = vmatpush.msra.mxu0 0.0
        %371 = vmatpush.msra.mxu0 0.0
        %372 = vmatpush.msra.mxu0 0.0
        %373 = vmatpush.msra.mxu0 0.0
        %374 = vmatpush.msra.mxu0 0.0
        %v375 = vand.u32 %v329, 4294901760
        %v376 = vsub.f32 %v329, %v375
        %v377 = vand.u32 %v376, 4294901760
        %v378 = vsub.f32 %v376, %v377
        %v379 = vand.u32 %v378, 4294901760
        %380 = vmatpush.msra.mxu0 %v379
        %v381 = vand.u32 %v314, 4294901760
        %v382 = vsub.f32 %v314, %v381
        %v383 = vand.u32 %v382, 4294901760
        %v384 = vsub.f32 %v382, %v383
        %v385 = vand.u32 %v384, 4294901760
        %386 = vmatpush.msra.mxu0 %v385
        %v387 = vand.u32 %v332, 4294901760
        %388 = vmatmul.f32.gmra.mxu0 %v387
        %v389 = vpop.f32.mrf.mxu0
        %v390 = vadd.f32 %v359, %v389
        %391 = vdwg.mxu0
        %392 = vmatpush.msra.mxu0 0.0
        %393 = vmatpush.msra.mxu0 0.0
        %394 = vmatpush.msra.mxu0 0.0
        %395 = vmatpush.msra.mxu0 0.0
        %396 = vmatpush.msra.mxu0 0.0
        %397 = vmatpush.msra.mxu0 0.0
        %398 = vmatpush.msra.mxu0 0.0
        %399 = vmatpush.msra.mxu0 0.0
        %400 = vmatpush.msra.mxu0 0.0
        %401 = vmatpush.msra.mxu0 0.0
        %402 = vmatpush.msra.mxu0 0.0
        %403 = vmatpush.msra.mxu0 0.0
        %404 = vmatpush.msra.mxu0 0.0
        %405 = vmatpush.msra.mxu0 0.0
        %v406 = vand.u32 %v329, 4294901760
        %v407 = vsub.f32 %v329, %v406
        %408 = vmatpush.msra.mxu0 %v407
        %v409 = vand.u32 %v314, 4294901760
        %v410 = vsub.f32 %v314, %v409
        %411 = vmatpush.msra.mxu0 %v410
        %v412 = vand.u32 %v332, 4294901760
        %v413 = vsub.f32 %v332, %v412
        %414 = vmatmul.f32.gmra.mxu0 %v413
        %v415 = vpop.f32.mrf.mxu0
        %v416 = vadd.f32 %v390, %v415
        %417 = vdwg.mxu0
        %418 = vmatpush.msra.mxu0 0.0
        %419 = vmatpush.msra.mxu0 0.0
        %420 = vmatpush.msra.mxu0 0.0
        %421 = vmatpush.msra.mxu0 0.0
        %422 = vmatpush.msra.mxu0 0.0
        %423 = vmatpush.msra.mxu0 0.0
        %424 = vmatpush.msra.mxu0 0.0
        %425 = vmatpush.msra.mxu0 0.0
        %426 = vmatpush.msra.mxu0 0.0
        %427 = vmatpush.msra.mxu0 0.0
        %428 = vmatpush.msra.mxu0 0.0
        %429 = vmatpush.msra.mxu0 0.0
        %430 = vmatpush.msra.mxu0 0.0
        %431 = vmatpush.msra.mxu0 0.0
        %v432 = vand.u32 %v329, 4294901760
        %433 = vmatpush.msra.mxu0 %v432
        %v434 = vand.u32 %v314, 4294901760
        %435 = vmatpush.msra.mxu0 %v434
        %v436 = vand.u32 %v332, 4294901760
        %v437 = vsub.f32 %v332, %v436
        %v438 = vand.u32 %v437, 4294901760
        %439 = vmatmul.f32.gmra.mxu0 %v438
        %v440 = vpop.f32.mrf.mxu0
        %v441 = vadd.f32 %v416, %v440
        %442 = vdwg.mxu0
        %443 = vmatpush.msra.mxu0 0.0
        %444 = vmatpush.msra.mxu0 0.0
        %445 = vmatpush.msra.mxu0 0.0
        %446 = vmatpush.msra.mxu0 0.0
        %447 = vmatpush.msra.mxu0 0.0
        %448 = vmatpush.msra.mxu0 0.0
        %449 = vmatpush.msra.mxu0 0.0
        %450 = vmatpush.msra.mxu0 0.0
        %451 = vmatpush.msra.mxu0 0.0
        %452 = vmatpush.msra.mxu0 0.0
        %453 = vmatpush.msra.mxu0 0.0
        %454 = vmatpush.msra.mxu0 0.0
        %455 = vmatpush.msra.mxu0 0.0
        %456 = vmatpush.msra.mxu0 0.0
        %v457 = vand.u32 %v329, 4294901760
        %v458 = vsub.f32 %v329, %v457
        %v459 = vand.u32 %v458, 4294901760
        %460 = vmatpush.msra.mxu0 %v459
        %v461 = vand.u32 %v314, 4294901760
        %v462 = vsub.f32 %v314, %v461
        %v463 = vand.u32 %v462, 4294901760
        %464 = vmatpush.msra.mxu0 %v463
        %v465 = vand.u32 %v332, 4294901760
        %466 = vmatmul.f32.gmra.mxu0 %v465
        %v467 = vpop.f32.mrf.mxu0
        %v468 = vadd.f32 %v441, %v467
        %469 = vdwg.mxu0
        %470 = vmatpush.msra.mxu0 0.0
        %471 = vmatpush.msra.mxu0 0.0
        %472 = vmatpush.msra.mxu0 0.0
        %473 = vmatpush.msra.mxu0 0.0
        %474 = vmatpush.msra.mxu0 0.0
        %475 = vmatpush.msra.mxu0 0.0
        %476 = vmatpush.msra.mxu0 0.0
        %477 = vmatpush.msra.mxu0 0.0
        %478 = vmatpush.msra.mxu0 0.0
        %479 = vmatpush.msra.mxu0 0.0
        %480 = vmatpush.msra.mxu0 0.0
        %481 = vmatpush.msra.mxu0 0.0
        %482 = vmatpush.msra.mxu0 0.0
        %483 = vmatpush.msra.mxu0 0.0
        %v484 = vand.u32 %v329, 4294901760
        %485 = vmatpush.msra.mxu0 %v484
        %v486 = vand.u32 %v314, 4294901760
        %487 = vmatpush.msra.mxu0 %v486
        %v488 = vand.u32 %v332, 4294901760
        %489 = vmatmul.f32.gmra.mxu0 %v488
        %v490 = vpop.f32.mrf.mxu0
        %v491 = vadd.f32 %v468, %v490
        %492 = vdwg.mxu0
        %v494 = vsel %vm330, %v250, 0
        %496 = vmatpush.msra.mxu0 0.0
        %497 = vmatpush.msra.mxu0 0.0
        %498 = vmatpush.msra.mxu0 0.0
        %499 = vmatpush.msra.mxu0 0.0
        %500 = vmatpush.msra.mxu0 0.0
        %501 = vmatpush.msra.mxu0 0.0
        %502 = vmatpush.msra.mxu0 0.0
        %503 = vmatpush.msra.mxu0 0.0
        %504 = vmatpush.msra.mxu0 0.0
        %505 = vmatpush.msra.mxu0 0.0
        %506 = vmatpush.msra.mxu0 0.0
        %507 = vmatpush.msra.mxu0 0.0
        %508 = vmatpush.msra.mxu0 0.0
        %509 = vmatpush.msra.mxu0 0.0
        %v510 = vand.u32 %v329, 4294901760
        %511 = vmatpush.msra.mxu0 %v510
        %v512 = vand.u32 %v314, 4294901760
        %513 = vmatpush.msra.mxu0 %v512
        %v514 = vand.u32 %v494, 4294901760
        %v515 = vsub.f32 %v494, %v514
        %v516 = vand.u32 %v515, 4294901760
        %v517 = vsub.f32 %v515, %v516
        %v518 = vand.u32 %v517, 4294901760
        %519 = vmatmul.f32.gmra.mxu0 %v518
        %v520 = vpop.f32.mrf.mxu0
        %v521 = vadd.f32 0.0, %v520
        %522 = vdwg.mxu0
        %523 = vmatpush.msra.mxu0 0.0
        %524 = vmatpush.msra.mxu0 0.0
        %525 = vmatpush.msra.mxu0 0.0
        %526 = vmatpush.msra.mxu0 0.0
        %527 = vmatpush.msra.mxu0 0.0
        %528 = vmatpush.msra.mxu0 0.0
        %529 = vmatpush.msra.mxu0 0.0
        %530 = vmatpush.msra.mxu0 0.0
        %531 = vmatpush.msra.mxu0 0.0
        %532 = vmatpush.msra.mxu0 0.0
        %533 = vmatpush.msra.mxu0 0.0
        %534 = vmatpush.msra.mxu0 0.0
        %535 = vmatpush.msra.mxu0 0.0
        %536 = vmatpush.msra.mxu0 0.0
        %v537 = vand.u32 %v329, 4294901760
        %v538 = vsub.f32 %v329, %v537
        %v539 = vand.u32 %v538, 4294901760
        %v540 = vsub.f32 %v538, %v539
        %v541 = vand.u32 %v540, 4294901760
        %542 = vmatpush.msra.mxu0 %v541
        %v543 = vand.u32 %v314, 4294901760
        %v544 = vsub.f32 %v314, %v543
        %v545 = vand.u32 %v544, 4294901760
        %v546 = vsub.f32 %v544, %v545
        %v547 = vand.u32 %v546, 4294901760
        %548 = vmatpush.msra.mxu0 %v547
        %v549 = vand.u32 %v494, 4294901760
        %550 = vmatmul.f32.gmra.mxu0 %v549
        %v551 = vpop.f32.mrf.mxu0
        %v552 = vadd.f32 %v521, %v551
        %553 = vdwg.mxu0
        %554 = vmatpush.msra.mxu0 0.0
        %555 = vmatpush.msra.mxu0 0.0
        %556 = vmatpush.msra.mxu0 0.0
        %557 = vmatpush.msra.mxu0 0.0
        %558 = vmatpush.msra.mxu0 0.0
        %559 = vmatpush.msra.mxu0 0.0
        %560 = vmatpush.msra.mxu0 0.0
        %561 = vmatpush.msra.mxu0 0.0
        %562 = vmatpush.msra.mxu0 0.0
        %563 = vmatpush.msra.mxu0 0.0
        %564 = vmatpush.msra.mxu0 0.0
        %565 = vmatpush.msra.mxu0 0.0
        %566 = vmatpush.msra.mxu0 0.0
        %567 = vmatpush.msra.mxu0 0.0
        %v568 = vand.u32 %v329, 4294901760
        %v569 = vsub.f32 %v329, %v568
        %570 = vmatpush.msra.mxu0 %v569
        %v571 = vand.u32 %v314, 4294901760
        %v572 = vsub.f32 %v314, %v571
        %573 = vmatpush.msra.mxu0 %v572
        %v574 = vand.u32 %v494, 4294901760
        %v575 = vsub.f32 %v494, %v574
        %576 = vmatmul.f32.gmra.mxu0 %v575
        %v577 = vpop.f32.mrf.mxu0
        %v578 = vadd.f32 %v552, %v577
        %579 = vdwg.mxu0
        %580 = vmatpush.msra.mxu0 0.0
        %581 = vmatpush.msra.mxu0 0.0
        %582 = vmatpush.msra.mxu0 0.0
        %583 = vmatpush.msra.mxu0 0.0
        %584 = vmatpush.msra.mxu0 0.0
        %585 = vmatpush.msra.mxu0 0.0
        %586 = vmatpush.msra.mxu0 0.0
        %587 = vmatpush.msra.mxu0 0.0
        %588 = vmatpush.msra.mxu0 0.0
        %589 = vmatpush.msra.mxu0 0.0
        %590 = vmatpush.msra.mxu0 0.0
        %591 = vmatpush.msra.mxu0 0.0
        %592 = vmatpush.msra.mxu0 0.0
        %593 = vmatpush.msra.mxu0 0.0
        %v594 = vand.u32 %v329, 4294901760
        %595 = vmatpush.msra.mxu0 %v594
        %v596 = vand.u32 %v314, 4294901760
        %597 = vmatpush.msra.mxu0 %v596
        %v598 = vand.u32 %v494, 4294901760
        %v599 = vsub.f32 %v494, %v598
        %v600 = vand.u32 %v599, 4294901760
        %601 = vmatmul.f32.gmra.mxu0 %v600
        %v602 = vpop.f32.mrf.mxu0
        %v603 = vadd.f32 %v578, %v602
        %604 = vdwg.mxu0
        %605 = vmatpush.msra.mxu0 0.0
        %606 = vmatpush.msra.mxu0 0.0
        %607 = vmatpush.msra.mxu0 0.0
        %608 = vmatpush.msra.mxu0 0.0
        %609 = vmatpush.msra.mxu0 0.0
        %610 = vmatpush.msra.mxu0 0.0
        %611 = vmatpush.msra.mxu0 0.0
        %612 = vmatpush.msra.mxu0 0.0
        %613 = vmatpush.msra.mxu0 0.0
        %614 = vmatpush.msra.mxu0 0.0
        %615 = vmatpush.msra.mxu0 0.0
        %616 = vmatpush.msra.mxu0 0.0
        %617 = vmatpush.msra.mxu0 0.0
        %618 = vmatpush.msra.mxu0 0.0
        %v619 = vand.u32 %v329, 4294901760
        %v620 = vsub.f32 %v329, %v619
        %v621 = vand.u32 %v620, 4294901760
        %622 = vmatpush.msra.mxu0 %v621
        %v623 = vand.u32 %v314, 4294901760
        %v624 = vsub.f32 %v314, %v623
        %v625 = vand.u32 %v624, 4294901760
        %626 = vmatpush.msra.mxu0 %v625
        %v627 = vand.u32 %v494, 4294901760
        %628 = vmatmul.f32.gmra.mxu0 %v627
        %v629 = vpop.f32.mrf.mxu0
        %v630 = vadd.f32 %v603, %v629
        %631 = vdwg.mxu0
        %632 = vmatpush.msra.mxu0 0.0
        %633 = vmatpush.msra.mxu0 0.0
        %634 = vmatpush.msra.mxu0 0.0
        %635 = vmatpush.msra.mxu0 0.0
        %636 = vmatpush.msra.mxu0 0.0
        %637 = vmatpush.msra.mxu0 0.0
        %638 = vmatpush.msra.mxu0 0.0
        %639 = vmatpush.msra.mxu0 0.0
        %640 = vmatpush.msra.mxu0 0.0
        %641 = vmatpush.msra.mxu0 0.0
        %642 = vmatpush.msra.mxu0 0.0
        %643 = vmatpush.msra.mxu0 0.0
        %644 = vmatpush.msra.mxu0 0.0
        %645 = vmatpush.msra.mxu0 0.0
        %v646 = vand.u32 %v329, 4294901760
        %647 = vmatpush.msra.mxu0 %v646
        %v648 = vand.u32 %v314, 4294901760
        %649 = vmatpush.msra.mxu0 %v648
        %v650 = vand.u32 %v494, 4294901760
        %651 = vmatmul.f32.gmra.mxu0 %v650
        %v652 = vpop.f32.mrf.mxu0
        %v653 = vadd.f32 %v630, %v652
        %654 = vdwg.mxu0
        %v655 = vmax.f32 %v491, %v653
        %v657 = vsel %vm330, %v655, 0
        %659 = vmatpush.msra.mxu0 0.0
        %660 = vmatpush.msra.mxu0 0.0
        %661 = vmatpush.msra.mxu0 0.0
        %662 = vmatpush.msra.mxu0 0.0
        %663 = vmatpush.msra.mxu0 0.0
        %664 = vmatpush.msra.mxu0 0.0
        %665 = vmatpush.msra.mxu0 0.0
        %666 = vmatpush.msra.mxu0 0.0
        %667 = vmatpush.msra.mxu0 0.0
        %668 = vmatpush.msra.mxu0 0.0
        %669 = vmatpush.msra.mxu0 0.0
        %670 = vmatpush.msra.mxu0 0.0
        %671 = vmatpush.msra.mxu0 0.0
        %672 = vmatpush.msra.mxu0 0.0
        %v673 = vand.u32 %v258, 4294901760
        %674 = vmatpush.msra.mxu0 %v673
        %v675 = vand.u32 %v257, 4294901760
        %676 = vmatpush.msra.mxu0 %v675
        %v677 = vand.u32 %v657, 4294901760
        %v678 = vsub.f32 %v657, %v677
        %v679 = vand.u32 %v678, 4294901760
        %v680 = vsub.f32 %v678, %v679
        %v681 = vand.u32 %v680, 4294901760
        %682 = vmatmul.f32.gmra.mxu0 %v681
        %v683 = vpop.f32.mrf.mxu0
        %v684 = vadd.f32 0.0, %v683
        %685 = vdwg.mxu0
        %686 = vmatpush.msra.mxu0 0.0
        %687 = vmatpush.msra.mxu0 0.0
        %688 = vmatpush.msra.mxu0 0.0
        %689 = vmatpush.msra.mxu0 0.0
        %690 = vmatpush.msra.mxu0 0.0
        %691 = vmatpush.msra.mxu0 0.0
        %692 = vmatpush.msra.mxu0 0.0
        %693 = vmatpush.msra.mxu0 0.0
        %694 = vmatpush.msra.mxu0 0.0
        %695 = vmatpush.msra.mxu0 0.0
        %696 = vmatpush.msra.mxu0 0.0
        %697 = vmatpush.msra.mxu0 0.0
        %698 = vmatpush.msra.mxu0 0.0
        %699 = vmatpush.msra.mxu0 0.0
        %v700 = vand.u32 %v258, 4294901760
        %v701 = vsub.f32 %v258, %v700
        %v702 = vand.u32 %v701, 4294901760
        %v703 = vsub.f32 %v701, %v702
        %v704 = vand.u32 %v703, 4294901760
        %705 = vmatpush.msra.mxu0 %v704
        %v706 = vand.u32 %v257, 4294901760
        %v707 = vsub.f32 %v257, %v706
        %v708 = vand.u32 %v707, 4294901760
        %v709 = vsub.f32 %v707, %v708
        %v710 = vand.u32 %v709, 4294901760
        %711 = vmatpush.msra.mxu0 %v710
        %v712 = vand.u32 %v657, 4294901760
        %713 = vmatmul.f32.gmra.mxu0 %v712
        %v714 = vpop.f32.mrf.mxu0
        %v715 = vadd.f32 %v684, %v714
        %716 = vdwg.mxu0
        %717 = vmatpush.msra.mxu0 0.0
        %718 = vmatpush.msra.mxu0 0.0
        %719 = vmatpush.msra.mxu0 0.0
        %720 = vmatpush.msra.mxu0 0.0
        %721 = vmatpush.msra.mxu0 0.0
        %722 = vmatpush.msra.mxu0 0.0
        %723 = vmatpush.msra.mxu0 0.0
        %724 = vmatpush.msra.mxu0 0.0
        %725 = vmatpush.msra.mxu0 0.0
        %726 = vmatpush.msra.mxu0 0.0
        %727 = vmatpush.msra.mxu0 0.0
        %728 = vmatpush.msra.mxu0 0.0
        %729 = vmatpush.msra.mxu0 0.0
        %730 = vmatpush.msra.mxu0 0.0
        %v731 = vand.u32 %v258, 4294901760
        %v732 = vsub.f32 %v258, %v731
        %733 = vmatpush.msra.mxu0 %v732
        %v734 = vand.u32 %v257, 4294901760
        %v735 = vsub.f32 %v257, %v734
        %736 = vmatpush.msra.mxu0 %v735
        %v737 = vand.u32 %v657, 4294901760
        %v738 = vsub.f32 %v657, %v737
        %739 = vmatmul.f32.gmra.mxu0 %v738
        %v740 = vpop.f32.mrf.mxu0
        %v741 = vadd.f32 %v715, %v740
        %742 = vdwg.mxu0
        %743 = vmatpush.msra.mxu0 0.0
        %744 = vmatpush.msra.mxu0 0.0
        %745 = vmatpush.msra.mxu0 0.0
        %746 = vmatpush.msra.mxu0 0.0
        %747 = vmatpush.msra.mxu0 0.0
        %748 = vmatpush.msra.mxu0 0.0
        %749 = vmatpush.msra.mxu0 0.0
        %750 = vmatpush.msra.mxu0 0.0
        %751 = vmatpush.msra.mxu0 0.0
        %752 = vmatpush.msra.mxu0 0.0
        %753 = vmatpush.msra.mxu0 0.0
        %754 = vmatpush.msra.mxu0 0.0
        %755 = vmatpush.msra.mxu0 0.0
        %756 = vmatpush.msra.mxu0 0.0
        %v757 = vand.u32 %v258, 4294901760
        %758 = vmatpush.msra.mxu0 %v757
        %v759 = vand.u32 %v257, 4294901760
        %760 = vmatpush.msra.mxu0 %v759
        %v761 = vand.u32 %v657, 4294901760
        %v762 = vsub.f32 %v657, %v761
        %v763 = vand.u32 %v762, 4294901760
        %764 = vmatmul.f32.gmra.mxu0 %v763
        %v765 = vpop.f32.mrf.mxu0
        %v766 = vadd.f32 %v741, %v765
        %767 = vdwg.mxu0
        %768 = vmatpush.msra.mxu0 0.0
        %769 = vmatpush.msra.mxu0 0.0
        %770 = vmatpush.msra.mxu0 0.0
        %771 = vmatpush.msra.mxu0 0.0
        %772 = vmatpush.msra.mxu0 0.0
        %773 = vmatpush.msra.mxu0 0.0
        %774 = vmatpush.msra.mxu0 0.0
        %775 = vmatpush.msra.mxu0 0.0
        %776 = vmatpush.msra.mxu0 0.0
        %777 = vmatpush.msra.mxu0 0.0
        %778 = vmatpush.msra.mxu0 0.0
        %779 = vmatpush.msra.mxu0 0.0
        %780 = vmatpush.msra.mxu0 0.0
        %781 = vmatpush.msra.mxu0 0.0
        %v782 = vand.u32 %v258, 4294901760
        %v783 = vsub.f32 %v258, %v782
        %v784 = vand.u32 %v783, 4294901760
        %785 = vmatpush.msra.mxu0 %v784
        %v786 = vand.u32 %v257, 4294901760
        %v787 = vsub.f32 %v257, %v786
        %v788 = vand.u32 %v787, 4294901760
        %789 = vmatpush.msra.mxu0 %v788
        %v790 = vand.u32 %v657, 4294901760
        %791 = vmatmul.f32.gmra.mxu0 %v790
        %v792 = vpop.f32.mrf.mxu0
        %v793 = vadd.f32 %v766, %v792
        %794 = vdwg.mxu0
        %795 = vmatpush.msra.mxu0 0.0
        %796 = vmatpush.msra.mxu0 0.0
        %797 = vmatpush.msra.mxu0 0.0
        %798 = vmatpush.msra.mxu0 0.0
        %799 = vmatpush.msra.mxu0 0.0
        %800 = vmatpush.msra.mxu0 0.0
        %801 = vmatpush.msra.mxu0 0.0
        %802 = vmatpush.msra.mxu0 0.0
        %803 = vmatpush.msra.mxu0 0.0
        %804 = vmatpush.msra.mxu0 0.0
        %805 = vmatpush.msra.mxu0 0.0
        %806 = vmatpush.msra.mxu0 0.0
        %807 = vmatpush.msra.mxu0 0.0
        %808 = vmatpush.msra.mxu0 0.0
        %v809 = vand.u32 %v258, 4294901760
        %810 = vmatpush.msra.mxu0 %v809
        %v811 = vand.u32 %v257, 4294901760
        %812 = vmatpush.msra.mxu0 %v811
        %v813 = vand.u32 %v657, 4294901760
        %814 = vmatmul.f32.gmra.mxu0 %v813
        %v815 = vpop.f32.mrf.mxu0
        %v816 = vadd.f32 %v793, %v815
        %817 = vdwg.mxu0
        %818 = vmatpush.msra.mxu0 0.0
        %819 = vmatpush.msra.mxu0 0.0
        %820 = vmatpush.msra.mxu0 0.0
        %821 = vmatpush.msra.mxu0 0.0
        %822 = vmatpush.msra.mxu0 0.0
        %823 = vmatpush.msra.mxu0 0.0
        %824 = vmatpush.msra.mxu0 0.0
        %825 = vmatpush.msra.mxu0 0.0
        %826 = vmatpush.msra.mxu0 0.0
        %827 = vmatpush.msra.mxu0 0.0
        %828 = vmatpush.msra.mxu0 0.0
        %829 = vmatpush.msra.mxu0 0.0
        %830 = vmatpush.msra.mxu0 0.0
        %831 = vmatpush.msra.mxu0 0.0
        %v832 = vand.u32 %v265, 4294901760
        %833 = vmatpush.msra.mxu0 %v832
        %v834 = vand.u32 %v264, 4294901760
        %835 = vmatpush.msra.mxu0 %v834
        %v836 = vand.u32 %v657, 4294901760
        %v837 = vsub.f32 %v657, %v836
        %v838 = vand.u32 %v837, 4294901760
        %v839 = vsub.f32 %v837, %v838
        %v840 = vand.u32 %v839, 4294901760
        %841 = vmatmul.f32.gmra.mxu0 %v840
        %v842 = vpop.f32.mrf.mxu0
        %v843 = vadd.f32 0.0, %v842
        %844 = vdwg.mxu0
        %845 = vmatpush.msra.mxu0 0.0
        %846 = vmatpush.msra.mxu0 0.0
        %847 = vmatpush.msra.mxu0 0.0
        %848 = vmatpush.msra.mxu0 0.0
        %849 = vmatpush.msra.mxu0 0.0
        %850 = vmatpush.msra.mxu0 0.0
        %851 = vmatpush.msra.mxu0 0.0
        %852 = vmatpush.msra.mxu0 0.0
        %853 = vmatpush.msra.mxu0 0.0
        %854 = vmatpush.msra.mxu0 0.0
        %855 = vmatpush.msra.mxu0 0.0
        %856 = vmatpush.msra.mxu0 0.0
        %857 = vmatpush.msra.mxu0 0.0
        %858 = vmatpush.msra.mxu0 0.0
        %v859 = vand.u32 %v265, 4294901760
        %v860 = vsub.f32 %v265, %v859
        %v861 = vand.u32 %v860, 4294901760
        %v862 = vsub.f32 %v860, %v861
        %v863 = vand.u32 %v862, 4294901760
        %864 = vmatpush.msra.mxu0 %v863
        %v865 = vand.u32 %v264, 4294901760
        %v866 = vsub.f32 %v264, %v865
        %v867 = vand.u32 %v866, 4294901760
        %v868 = vsub.f32 %v866, %v867
        %v869 = vand.u32 %v868, 4294901760
        %870 = vmatpush.msra.mxu0 %v869
        %v871 = vand.u32 %v657, 4294901760
        %872 = vmatmul.f32.gmra.mxu0 %v871
        %v873 = vpop.f32.mrf.mxu0
        %v874 = vadd.f32 %v843, %v873
        %875 = vdwg.mxu0
        %876 = vmatpush.msra.mxu0 0.0
        %877 = vmatpush.msra.mxu0 0.0
        %878 = vmatpush.msra.mxu0 0.0
        %879 = vmatpush.msra.mxu0 0.0
        %880 = vmatpush.msra.mxu0 0.0
        %881 = vmatpush.msra.mxu0 0.0
        %882 = vmatpush.msra.mxu0 0.0
        %883 = vmatpush.msra.mxu0 0.0
        %884 = vmatpush.msra.mxu0 0.0
        %885 = vmatpush.msra.mxu0 0.0
        %886 = vmatpush.msra.mxu0 0.0
        %887 = vmatpush.msra.mxu0 0.0
        %888 = vmatpush.msra.mxu0 0.0
        %889 = vmatpush.msra.mxu0 0.0
        %v890 = vand.u32 %v265, 4294901760
        %v891 = vsub.f32 %v265, %v890
        %892 = vmatpush.msra.mxu0 %v891
        %v893 = vand.u32 %v264, 4294901760
        %v894 = vsub.f32 %v264, %v893
        %895 = vmatpush.msra.mxu0 %v894
        %v896 = vand.u32 %v657, 4294901760
        %v897 = vsub.f32 %v657, %v896
        %898 = vmatmul.f32.gmra.mxu0 %v897
        %v899 = vpop.f32.mrf.mxu0
        %v900 = vadd.f32 %v874, %v899
        %901 = vdwg.mxu0
        %902 = vmatpush.msra.mxu0 0.0
        %903 = vmatpush.msra.mxu0 0.0
        %904 = vmatpush.msra.mxu0 0.0
        %905 = vmatpush.msra.mxu0 0.0
        %906 = vmatpush.msra.mxu0 0.0
        %907 = vmatpush.msra.mxu0 0.0
        %908 = vmatpush.msra.mxu0 0.0
        %909 = vmatpush.msra.mxu0 0.0
        %910 = vmatpush.msra.mxu0 0.0
        %911 = vmatpush.msra.mxu0 0.0
        %912 = vmatpush.msra.mxu0 0.0
        %913 = vmatpush.msra.mxu0 0.0
        %914 = vmatpush.msra.mxu0 0.0
        %915 = vmatpush.msra.mxu0 0.0
        %v916 = vand.u32 %v265, 4294901760
        %917 = vmatpush.msra.mxu0 %v916
        %v918 = vand.u32 %v264, 4294901760
        %919 = vmatpush.msra.mxu0 %v918
        %v920 = vand.u32 %v657, 4294901760
        %v921 = vsub.f32 %v657, %v920
        %v922 = vand.u32 %v921, 4294901760
        %923 = vmatmul.f32.gmra.mxu0 %v922
        %v924 = vpop.f32.mrf.mxu0
        %v925 = vadd.f32 %v900, %v924
        %926 = vdwg.mxu0
        %927 = vmatpush.msra.mxu0 0.0
        %928 = vmatpush.msra.mxu0 0.0
        %929 = vmatpush.msra.mxu0 0.0
        %930 = vmatpush.msra.mxu0 0.0
        %931 = vmatpush.msra.mxu0 0.0
        %932 = vmatpush.msra.mxu0 0.0
        %933 = vmatpush.msra.mxu0 0.0
        %934 = vmatpush.msra.mxu0 0.0
        %935 = vmatpush.msra.mxu0 0.0
        %936 = vmatpush.msra.mxu0 0.0
        %937 = vmatpush.msra.mxu0 0.0
        %938 = vmatpush.msra.mxu0 0.0
        %939 = vmatpush.msra.mxu0 0.0
        %940 = vmatpush.msra.mxu0 0.0
        %v941 = vand.u32 %v265, 4294901760
        %v942 = vsub.f32 %v265, %v941
        %v943 = vand.u32 %v942, 4294901760
        %944 = vmatpush.msra.mxu0 %v943
        %v945 = vand.u32 %v264, 4294901760
        %v946 = vsub.f32 %v264, %v945
        %v947 = vand.u32 %v946, 4294901760
        %948 = vmatpush.msra.mxu0 %v947
        %v949 = vand.u32 %v657, 4294901760
        %950 = vmatmul.f32.gmra.mxu0 %v949
        %v951 = vpop.f32.mrf.mxu0
        %v952 = vadd.f32 %v925, %v951
        %953 = vdwg.mxu0
        %954 = vmatpush.msra.mxu0 0.0
        %955 = vmatpush.msra.mxu0 0.0
        %956 = vmatpush.msra.mxu0 0.0
        %957 = vmatpush.msra.mxu0 0.0
        %958 = vmatpush.msra.mxu0 0.0
        %959 = vmatpush.msra.mxu0 0.0
        %960 = vmatpush.msra.mxu0 0.0
        %961 = vmatpush.msra.mxu0 0.0
        %962 = vmatpush.msra.mxu0 0.0
        %963 = vmatpush.msra.mxu0 0.0
        %964 = vmatpush.msra.mxu0 0.0
        %965 = vmatpush.msra.mxu0 0.0
        %966 = vmatpush.msra.mxu0 0.0
        %967 = vmatpush.msra.mxu0 0.0
        %v968 = vand.u32 %v265, 4294901760
        %969 = vmatpush.msra.mxu0 %v968
        %v970 = vand.u32 %v264, 4294901760
        %971 = vmatpush.msra.mxu0 %v970
        %v972 = vand.u32 %v657, 4294901760
        %973 = vmatmul.f32.gmra.mxu0 %v972
        %v974 = vpop.f32.mrf.mxu0
        %v975 = vadd.f32 %v952, %v974
        %976 = vdwg.mxu0
        %v977 = vmax.f32 %v816, %v975
        %v978 = vadd.f32 %v491, %v653
        %v980 = vsel %vm330, %v978, 0
        %982 = vmatpush.msra.mxu0 0.0
        %983 = vmatpush.msra.mxu0 0.0
        %984 = vmatpush.msra.mxu0 0.0
        %985 = vmatpush.msra.mxu0 0.0
        %986 = vmatpush.msra.mxu0 0.0
        %987 = vmatpush.msra.mxu0 0.0
        %988 = vmatpush.msra.mxu0 0.0
        %989 = vmatpush.msra.mxu0 0.0
        %990 = vmatpush.msra.mxu0 0.0
        %991 = vmatpush.msra.mxu0 0.0
        %992 = vmatpush.msra.mxu0 0.0
        %993 = vmatpush.msra.mxu0 0.0
        %994 = vmatpush.msra.mxu0 0.0
        %995 = vmatpush.msra.mxu0 0.0
        %v996 = vand.u32 %v276, 4294901760
        %997 = vmatpush.msra.mxu0 %v996
        %v998 = vand.u32 %v275, 4294901760
        %999 = vmatpush.msra.mxu0 %v998
        %v1000 = vand.u32 %v980, 4294901760
        %v1001 = vsub.f32 %v980, %v1000
        %v1002 = vand.u32 %v1001, 4294901760
        %v1003 = vsub.f32 %v1001, %v1002
        %v1004 = vand.u32 %v1003, 4294901760
        %1005 = vmatmul.f32.gmra.mxu0 %v1004
        %v1006 = vpop.f32.mrf.mxu0
        %v1007 = vadd.f32 0.0, %v1006
        %1008 = vdwg.mxu0
        %1009 = vmatpush.msra.mxu0 0.0
        %1010 = vmatpush.msra.mxu0 0.0
        %1011 = vmatpush.msra.mxu0 0.0
        %1012 = vmatpush.msra.mxu0 0.0
        %1013 = vmatpush.msra.mxu0 0.0
        %1014 = vmatpush.msra.mxu0 0.0
        %1015 = vmatpush.msra.mxu0 0.0
        %1016 = vmatpush.msra.mxu0 0.0
        %1017 = vmatpush.msra.mxu0 0.0
        %1018 = vmatpush.msra.mxu0 0.0
        %1019 = vmatpush.msra.mxu0 0.0
        %1020 = vmatpush.msra.mxu0 0.0
        %1021 = vmatpush.msra.mxu0 0.0
        %1022 = vmatpush.msra.mxu0 0.0
        %v1023 = vand.u32 %v276, 4294901760
        %v1024 = vsub.f32 %v276, %v1023
        %v1025 = vand.u32 %v1024, 4294901760
        %v1026 = vsub.f32 %v1024, %v1025
        %v1027 = vand.u32 %v1026, 4294901760
        %1028 = vmatpush.msra.mxu0 %v1027
        %v1029 = vand.u32 %v275, 4294901760
        %v1030 = vsub.f32 %v275, %v1029
        %v1031 = vand.u32 %v1030, 4294901760
        %v1032 = vsub.f32 %v1030, %v1031
        %v1033 = vand.u32 %v1032, 4294901760
        %1034 = vmatpush.msra.mxu0 %v1033
        %v1035 = vand.u32 %v980, 4294901760
        %1036 = vmatmul.f32.gmra.mxu0 %v1035
        %v1037 = vpop.f32.mrf.mxu0
        %v1038 = vadd.f32 %v1007, %v1037
        %1039 = vdwg.mxu0
        %1040 = vmatpush.msra.mxu0 0.0
        %1041 = vmatpush.msra.mxu0 0.0
        %1042 = vmatpush.msra.mxu0 0.0
        %1043 = vmatpush.msra.mxu0 0.0
        %1044 = vmatpush.msra.mxu0 0.0
        %1045 = vmatpush.msra.mxu0 0.0
        %1046 = vmatpush.msra.mxu0 0.0
        %1047 = vmatpush.msra.mxu0 0.0
        %1048 = vmatpush.msra.mxu0 0.0
        %1049 = vmatpush.msra.mxu0 0.0
        %1050 = vmatpush.msra.mxu0 0.0
        %1051 = vmatpush.msra.mxu0 0.0
        %1052 = vmatpush.msra.mxu0 0.0
        %1053 = vmatpush.msra.mxu0 0.0
        %v1054 = vand.u32 %v276, 4294901760
        %v1055 = vsub.f32 %v276, %v1054
        %1056 = vmatpush.msra.mxu0 %v1055
        %v1057 = vand.u32 %v275, 4294901760
        %v1058 = vsub.f32 %v275, %v1057
        %1059 = vmatpush.msra.mxu0 %v1058
        %v1060 = vand.u32 %v980, 4294901760
        %v1061 = vsub.f32 %v980, %v1060
        %1062 = vmatmul.f32.gmra.mxu0 %v1061
        %v1063 = vpop.f32.mrf.mxu0
        %v1064 = vadd.f32 %v1038, %v1063
        %1065 = vdwg.mxu0
        %1066 = vmatpush.msra.mxu0 0.0
        %1067 = vmatpush.msra.mxu0 0.0
        %1068 = vmatpush.msra.mxu0 0.0
        %1069 = vmatpush.msra.mxu0 0.0
        %1070 = vmatpush.msra.mxu0 0.0
        %1071 = vmatpush.msra.mxu0 0.0
        %1072 = vmatpush.msra.mxu0 0.0
        %1073 = vmatpush.msra.mxu0 0.0
        %1074 = vmatpush.msra.mxu0 0.0
        %1075 = vmatpush.msra.mxu0 0.0
        %1076 = vmatpush.msra.mxu0 0.0
        %1077 = vmatpush.msra.mxu0 0.0
        %1078 = vmatpush.msra.mxu0 0.0
        %1079 = vmatpush.msra.mxu0 0.0
        %v1080 = vand.u32 %v276, 4294901760
        %1081 = vmatpush.msra.mxu0 %v1080
        %v1082 = vand.u32 %v275, 4294901760
        %1083 = vmatpush.msra.mxu0 %v1082
        %v1084 = vand.u32 %v980, 4294901760
        %v1085 = vsub.f32 %v980, %v1084
        %v1086 = vand.u32 %v1085, 4294901760
        %1087 = vmatmul.f32.gmra.mxu0 %v1086
        %v1088 = vpop.f32.mrf.mxu0
        %v1089 = vadd.f32 %v1064, %v1088
        %1090 = vdwg.mxu0
        %1091 = vmatpush.msra.mxu0 0.0
        %1092 = vmatpush.msra.mxu0 0.0
        %1093 = vmatpush.msra.mxu0 0.0
        %1094 = vmatpush.msra.mxu0 0.0
        %1095 = vmatpush.msra.mxu0 0.0
        %1096 = vmatpush.msra.mxu0 0.0
        %1097 = vmatpush.msra.mxu0 0.0
        %1098 = vmatpush.msra.mxu0 0.0
        %1099 = vmatpush.msra.mxu0 0.0
        %1100 = vmatpush.msra.mxu0 0.0
        %1101 = vmatpush.msra.mxu0 0.0
        %1102 = vmatpush.msra.mxu0 0.0
        %1103 = vmatpush.msra.mxu0 0.0
        %1104 = vmatpush.msra.mxu0 0.0
        %v1105 = vand.u32 %v276, 4294901760
        %v1106 = vsub.f32 %v276, %v1105
        %v1107 = vand.u32 %v1106, 4294901760
        %1108 = vmatpush.msra.mxu0 %v1107
        %v1109 = vand.u32 %v275, 4294901760
        %v1110 = vsub.f32 %v275, %v1109
        %v1111 = vand.u32 %v1110, 4294901760
        %1112 = vmatpush.msra.mxu0 %v1111
        %v1113 = vand.u32 %v980, 4294901760
        %1114 = vmatmul.f32.gmra.mxu0 %v1113
        %v1115 = vpop.f32.mrf.mxu0
        %v1116 = vadd.f32 %v1089, %v1115
        %1117 = vdwg.mxu0
        %1118 = vmatpush.msra.mxu0 0.0
        %1119 = vmatpush.msra.mxu0 0.0
        %1120 = vmatpush.msra.mxu0 0.0
        %1121 = vmatpush.msra.mxu0 0.0
        %1122 = vmatpush.msra.mxu0 0.0
        %1123 = vmatpush.msra.mxu0 0.0
        %1124 = vmatpush.msra.mxu0 0.0
        %1125 = vmatpush.msra.mxu0 0.0
        %1126 = vmatpush.msra.mxu0 0.0
        %1127 = vmatpush.msra.mxu0 0.0
        %1128 = vmatpush.msra.mxu0 0.0
        %1129 = vmatpush.msra.mxu0 0.0
        %1130 = vmatpush.msra.mxu0 0.0
        %1131 = vmatpush.msra.mxu0 0.0
        %v1132 = vand.u32 %v276, 4294901760
        %1133 = vmatpush.msra.mxu0 %v1132
        %v1134 = vand.u32 %v275, 4294901760
        %1135 = vmatpush.msra.mxu0 %v1134
        %v1136 = vand.u32 %v980, 4294901760
        %1137 = vmatmul.f32.gmra.mxu0 %v1136
        %v1138 = vpop.f32.mrf.mxu0
        %v1139 = vadd.f32 %v1116, %v1138
        %1140 = vdwg.mxu0
        %v1141 = vmul.f32 %v1139, 0.25
        %v1142 = vadd.f32 %v977, %v1141
        %v1143 = vld [vmem:[%s209] sm:$0xff]
        %v1144 = vld [vmem:[%s209 + $0x8] sm:$0xff]
        %v1145 = vld [vmem:[%s209 + $0x10] sm:$0xff]
        %v1146 = vld [vmem:[%s209 + $0x18] sm:$0xff]
        %v1147 = vmul.f32 %v1143, %v1142
        %v1148 = vmul.f32 %v1144, %v1142
        %v1149 = vmul.f32 %v1145, %v1142
        %v1150 = vmul.f32 %v1146, %v1142
        %vm1151 = vcmask 64512
        %1152 = vst.msk [vmem:[%s235] sm:$0xff] %vm1151, %v1147
        %1153 = vst.msk [vmem:[%s235 + $0x8] sm:$0xff] %vm1151, %v1148
        %1154 = vst.msk [vmem:[%s235 + $0x10] sm:$0xff] %vm1151, %v1149
        %1155 = vst.msk [vmem:[%s235 + $0x18] sm:$0xff] %vm1151, %v1150
        %s1156 = sand.u32 %s109, 1
        %s1157 = scalar_lea.sflag [#allocation6], %s1156
        %s1158 = sand.u32 %s109, 1
        %s1159 = smul.addr %s1158, 32
        %s1160 = scalar_lea.vmem [#allocation9], %s1159
        // Predicated region
        $region37: #{tpu_custom_call.1} parent=27 // pred_check
          %p1161 = pneg %p119
        $region38: #{tpu_custom_call.1} parent=27 // pred_check_branch
          %1163 = sbr.rel (%p1161) target = $region40
        $region39: #{tpu_custom_call.1} parent=27 // pred_region
          %1165 = vsyncadd %s1157, 0
          %s1166 = smul.addr %s35, 4
          %s1167 = sadd.s32 %s36, %s1166
          %s1168 = smul.addr %s1167, 8
          %s1169 = scalar_lea.hbm %s3, %s1168
          %s1170 = sshll.u32 %s1160, 4
          %s1171 = int_to_ptr.vmem [resolvable:$true] %s1170
          %s1172 = sshll.u32 %s1169, 4
          %s1173 = int_to_ptr.hbm [resolvable:$true] %s1172
          %1178 = dma.vmem_to_hbm [thread:$0]  %s1171, 512, %s1173, %s1157, 128, 128, 8
        $region40: #{tpu_custom_call.1} parent=27 // pred_fallthru
          _
      $region28: #{tpu_custom_call.1} parent=5 // pred_fallthru
        _
      %p1179 = scmp.le.s32.totalorder 2, %s26
      // Predicated region
      $region41: #{tpu_custom_call.1} parent=5 // pred_check
        %p1180 = pneg %p1179
      $region42: #{tpu_custom_call.1} parent=5 // pred_check_branch
        %1182 = sbr.rel (%p1180) target = $region44
      $region43: #{tpu_custom_call.1} parent=5 // pred_region
        %s1183 = ssub.s32 %s26, 2
        // Predicated region
        $region45: #{tpu_custom_call.1} parent=43 // pred_check
          %p1184 = pneg %p125
        $region46: #{tpu_custom_call.1} parent=43 // pred_check_branch
          %1186 = sbr.rel (%p1184) target = $region48
        $region47: #{tpu_custom_call.1} parent=43 // pred_region
          %s1187 = sand.u32 %s110, 1
          %s1188 = scalar_lea.sflag [#allocation6], %s1187
          %s1189 = sand.u32 %s110, 1
          %s1190 = smul.addr %s1189, 32
          %s1191 = scalar_lea.vmem [#allocation9], %s1190
          %1193 = dma.done %s1188, 512
        $region48: #{tpu_custom_call.1} parent=43 // pred_fallthru
          _
      $region44: #{tpu_custom_call.1} parent=5 // pred_fallthru
        _
    $region6: #{tpu_custom_call.1} parent=1 // loop_footer
      %s30 = sadd.s32 1, %s26
    $region7: #{tpu_custom_call.1} parent=1 // loop_footer_branch
      %25 = sbr.rel target = $region3
    $region8: #{tpu_custom_call.1} parent=1 // loop_exit
      _
    %1194 = vsyncpa [#allocation5], 1
    %s1195 = scalar_lea.sflag [#allocation5], 1
    %1196 = vsyncpa %s1195, 1
    %1197 = vsyncpa [#allocation8], 1
    %s1198 = scalar_lea.sflag [#allocation8], 1
    %1199 = vsyncpa %s1198, 1
    %1200 = vsyncpa [#allocation6], 1
    %s1201 = scalar_lea.sflag [#allocation6], 1
    %1202 = vsyncpa %s1201, 1

</llo_original>
